<compile_context>
chip_gen: v7x
topology: tpu7x:2x2x1
jax: 0.10.0
libtpu: 0.0.40
codegen_flags: <defaults>
</compile_context>

<pallas_src>
import functools

import jax
import jax.numpy as jnp
import numpy as np
from jax.experimental import pallas as pl
from jax.experimental.pallas import tpu as pltpu


def _round_up(x: int, m: int) -> int:
    return ((x + m - 1) // m) * m


# ---------------------------------------------------------------------------
# Tiled matmul + bias (+ optional ReLU):  y = x @ w_t + b
# ---------------------------------------------------------------------------
def _matmul_bias_kernel(x_ref, w_ref, b_ref, o_ref, acc_ref, *, apply_relu):
    k = pl.program_id(2)

    @pl.when(k == 0)
    def _():
        acc_ref[...] = jnp.zeros_like(acc_ref)

    acc_ref[...] += jnp.dot(
        x_ref[...], w_ref[...], preferred_element_type=jnp.float32
    )

    @pl.when(k == pl.num_programs(2) - 1)
    def _():
        y = acc_ref[...] + b_ref[...]          # (1, tn) broadcasts over rows
        if apply_relu:
            y = jnp.maximum(y, 0.0)
        o_ref[...] = y.astype(o_ref.dtype)


def matmul_bias(x, w_t, b, *, apply_relu=False,
                tm_target=256, tn_target=512, tk_target=512):
    """y = relu?(x @ w_t + b).   x: (M, K), w_t: (K, N) pre-transposed, b: (N,)."""
    M, K = x.shape
    K2, N = w_t.shape
    assert K == K2, (K, K2)
    assert b.shape == (N,)

    # Sublane dim (M) aligned to 8, lane dims (K, N) aligned to 128 (lane-dense).
    tm = min(tm_target, _round_up(M, 8))
    tk = min(tk_target, _round_up(K, 128))
    tn = min(tn_target, _round_up(N, 128))
    Mp, Kp, Np = _round_up(M, tm), _round_up(K, tk), _round_up(N, tn)

    xp = x if (Mp, Kp) == (M, K) else jnp.pad(x, ((0, Mp - M), (0, Kp - K)))
    wp = w_t if (Kp, Np) == (K, N) else jnp.pad(w_t, ((0, Kp - K), (0, Np - N)))
    bp = (b if Np == N else jnp.pad(b, (0, Np - N))).reshape(1, Np)

    grid = (Mp // tm, Np // tn, Kp // tk)   # K last (reduction axis)

    out = pl.pallas_call(
        functools.partial(_matmul_bias_kernel, apply_relu=apply_relu),
        out_shape=jax.ShapeDtypeStruct((Mp, Np), x.dtype),
        grid_spec=pltpu.PrefetchScalarGridSpec(
            num_scalar_prefetch=0,
            grid=grid,
            in_specs=[
                pl.BlockSpec((tm, tk), lambda i, j, k: (i, k)),
                pl.BlockSpec((tk, tn), lambda i, j, k: (k, j)),
                pl.BlockSpec((1, tn), lambda i, j, k: (0, j)),
            ],
            out_specs=pl.BlockSpec((tm, tn), lambda i, j, k: (i, j)),
            scratch_shapes=[pltpu.VMEM((tm, tn), jnp.float32)],
        ),
        compiler_params=pltpu.CompilerParams(
            dimension_semantics=("parallel", "parallel", "arbitrary"),
            vmem_limit_bytes=48 * 1024 * 1024,
        ),
    )(xp, wp, bp)

    if (Mp, Np) != (M, N):
        out = out[:M, :N]
    return out


# ---------------------------------------------------------------------------
# Mean over the point axis:  (B, L, C) -> (B, C)
# ---------------------------------------------------------------------------
def _mean_points_kernel(x_ref, o_ref, acc_ref, *, inv_n):
    l = pl.program_id(0)

    @pl.when(l == 0)
    def _():
        acc_ref[...] = jnp.zeros_like(acc_ref)

    acc_ref[...] += jnp.sum(x_ref[...].astype(jnp.float32), axis=1)

    @pl.when(l == pl.num_programs(0) - 1)
    def _():
        o_ref[...] = (acc_ref[...] * inv_n).astype(o_ref.dtype)


def mean_over_points(x, *, tl_target=512):
    """Mean over axis 1 of (B, L, C); zero-padded L chunks contribute nothing."""
    B, L, C = x.shape
    tl = min(tl_target, _round_up(L, 8))
    Lp = _round_up(L, tl)
    xp = x if Lp == L else jnp.pad(x, ((0, 0), (0, Lp - L), (0, 0)))

    return pl.pallas_call(
        functools.partial(_mean_points_kernel, inv_n=1.0 / L),
        out_shape=jax.ShapeDtypeStruct((B, C), x.dtype),
        grid_spec=pltpu.PrefetchScalarGridSpec(
            num_scalar_prefetch=0,
            grid=(Lp // tl,),
            in_specs=[pl.BlockSpec((B, tl, C), lambda l: (0, l, 0))],
            out_specs=pl.BlockSpec((B, C), lambda l: (0, 0)),
            scratch_shapes=[pltpu.VMEM((B, C), jnp.float32)],
        ),
        compiler_params=pltpu.CompilerParams(
            dimension_semantics=("arbitrary",),
        ),
    )(xp)


# ---------------------------------------------------------------------------
# Parameters (PyTorch-style layout & init) and the full forward pass
# ---------------------------------------------------------------------------
def init_params(key, point_dim, local_hidden, global_hidden):
    """Weights in PyTorch (out_features, in_features) layout, U(-1/sqrt(fan_in), ...)."""
    params = {"local": [], "global": []}
    prev = point_dim
    for h in local_hidden:
        key, kw, kb = jax.random.split(key, 3)
        bound = 1.0 / float(np.sqrt(prev))
        w = jax.random.uniform(kw, (h, prev), jnp.float32, -bound, bound)
        b = jax.random.uniform(kb, (h,), jnp.float32, -bound, bound)
        params["local"].append((w, b))
        prev = h
    for h in list(global_hidden) + [1]:
        key, kw, kb = jax.random.split(key, 3)
        bound = 1.0 / float(np.sqrt(prev))
        w = jax.random.uniform(kw, (h, prev), jnp.float32, -bound, bound)
        b = jax.random.uniform(kb, (h,), jnp.float32, -bound, bound)
        params["global"].append((w, b))
        prev = h
    return params


def prepare_params(params):
    """One-time transpose of every weight to (in, out) layout so the per-call
    hot path never pays an HBM transpose (perf-review item)."""
    return {
        "local": [(jnp.asarray(w).T, jnp.asarray(b)) for (w, b) in params["local"]],
        "global": [(jnp.asarray(w).T, jnp.asarray(b)) for (w, b) in params["global"]],
    }


@jax.jit
def energy_point_residual_forward(point_cloud, prepared):
    """point_cloud: (B, point_dim, num_point) -> (B, 1).

    Matches energy_point_residual.forward (batch_norm='', activation='ReLU',
    swap_axis=True => mean over the point axis), out_local=False path.
    """
    B, C, L = point_cloud.shape
    # pointwise Conv1d == per-point Linear: flatten points into the row dim
    h = point_cloud.transpose(0, 2, 1).reshape(B * L, C)
    for (w_t, b) in prepared["local"]:
        h = matmul_bias(h, w_t, b, apply_relu=True)
    h = mean_over_points(h.reshape(B, L, -1))
    n_glob = len(prepared["global"])
    for idx, (w_t, b) in enumerate(prepared["global"]):
        h = matmul_bias(h, w_t, b, apply_relu=(idx < n_glob - 1))
    return h


def reference_forward(point_cloud, params):
    """Plain NumPy (float64) reference of the same forward pass."""
    x = np.asarray(point_cloud, dtype=np.float64)
    B, C, L = x.shape
    h = np.transpose(x, (0, 2, 1)).reshape(B * L, C)
    for (w, b) in params["local"]:
        h = np.maximum(h @ np.asarray(w, np.float64).T + np.asarray(b, np.float64), 0.0)
    h = h.reshape(B, L, -1).mean(axis=1)
    n_glob = len(params["global"])
    for idx, (w, b) in enumerate(params["global"]):
        h = h @ np.asarray(w, np.float64).T + np.asarray(b, np.float64)
        if idx < n_glob - 1:
            h = np.maximum(h, 0.0)
    return h


if __name__ == "__main__":
    key = jax.random.PRNGKey(0)
    k_params, k_x = jax.random.split(key)

    # Small config consistent with the module
    B, point_dim, num_point = 2, 3, 16
    local_hidden = (32, 64)
    global_hidden = (64, 32)

    params = init_params(k_params, point_dim, local_hidden, global_hidden)
    prepared = prepare_params(params)   # one-time (in, out) weight layout

    point_cloud = jax.random.normal(k_x, (B, point_dim, num_point), dtype=jnp.float32)

    out = energy_point_residual_forward(point_cloud, prepared)
    out = jax.block_until_ready(out)

    ref = reference_forward(point_cloud, params)
    assert out.shape == (B, 1), out.shape
    assert np.allclose(np.asarray(out), ref, rtol=1e-3, atol=1e-3), (
        "mismatch vs reference:\n{}\n{}".format(np.asarray(out), ref))

    print("KERNEL_OK")
</pallas_src>

<mosaic_0001>
module attributes {stable_mosaic.version = 11 : i64} {
  func.func @_matmul_bias_kernel(%arg0: i32, %arg1: i32, %arg2: i32, %arg3: memref<32x128xf32, #tpu.memory_space<vmem>>, %arg4: memref<128x128xf32, #tpu.memory_space<vmem>>, %arg5: memref<1x128xf32, #tpu.memory_space<vmem>>, %arg6: memref<32x128xf32, #tpu.memory_space<vmem>>, %arg7: memref<32x128xf32, #tpu.memory_space<vmem>>) attributes {dimension_semantics = [#tpu.dimension_semantics<parallel>, #tpu.dimension_semantics<parallel>, #tpu.dimension_semantics<arbitrary>], iteration_bounds = array<i64: 1, 1, 1>, scalar_prefetch = 0 : i64, scratch_operands = 1 : i64, tpu.core_type = #tpu.core_type<tc>, window_params = [{transform_indices = @transform_0, window_bounds = array<i64: 32, 128>}, {transform_indices = @transform_1, window_bounds = array<i64: 128, 128>}, {transform_indices = @transform_2, window_bounds = array<i64: 1, 128>}, {transform_indices = @transform_3, window_bounds = array<i64: 32, 128>}]} {
    %c0_i32 = arith.constant 0 : i32
    %0 = arith.cmpi eq, %arg2, %c0_i32 : i32
    %1 = arith.extui %0 : i1 to i32
    %c0_i32_0 = arith.constant 0 : i32
    %2 = arith.cmpi ne, %1, %c0_i32_0 : i32
    scf.if %2 {
      %cst_10 = arith.constant 0.000000e+00 : f32
      %12 = vector.broadcast %cst_10 : f32 to vector<32x128xf32>
      %c0_11 = arith.constant 0 : index
      %c0_12 = arith.constant 0 : index
      %13 = vector.load %arg7[%c0_11, %c0_12] : memref<32x128xf32, #tpu.memory_space<vmem>>, vector<32x128xf32>
      tpu.vector_store %arg7[%c0_11, %c0_12], %12 {strides = array<i32>} : memref<32x128xf32, #tpu.memory_space<vmem>>, vector<32x128xf32>,
    } else {
    }
    %c0 = arith.constant 0 : index
    %c0_1 = arith.constant 0 : index
    %3 = vector.load %arg7[%c0, %c0_1] : memref<32x128xf32, #tpu.memory_space<vmem>>, vector<32x128xf32>
    %c0_2 = arith.constant 0 : index
    %c0_3 = arith.constant 0 : index
    %4 = vector.load %arg3[%c0_2, %c0_3] : memref<32x128xf32, #tpu.memory_space<vmem>>, vector<32x128xf32>
    %c0_4 = arith.constant 0 : index
    %c0_5 = arith.constant 0 : index
    %5 = vector.load %arg4[%c0_4, %c0_5] : memref<128x128xf32, #tpu.memory_space<vmem>>, vector<128x128xf32>
    %cst = arith.constant dense<0.000000e+00> : vector<32x128xf32>
    %6 = tpu.matmul %4, %5, %cst {dimension_numbers = #tpu.dot_dimension_numbers<[1], [0], [0], [1], [0, 0, 1, 1], [], []>} : vector<32x128xf32>, vector<128x128xf32>, vector<32x128xf32> -> vector<32x128xf32>
    %7 = arith.addf %3, %6 : vector<32x128xf32>
    %c0_6 = arith.constant 0 : index
    %c0_7 = arith.constant 0 : index
    %8 = vector.load %arg7[%c0_6, %c0_7] : memref<32x128xf32, #tpu.memory_space<vmem>>, vector<32x128xf32>
    tpu.vector_store %arg7[%c0_6, %c0_7], %7 {strides = array<i32>} : memref<32x128xf32, #tpu.memory_space<vmem>>, vector<32x128xf32>,
    %c0_i32_8 = arith.constant 0 : i32
    %9 = arith.cmpi eq, %arg2, %c0_i32_8 : i32
    %10 = arith.extui %9 : i1 to i32
    %c0_i32_9 = arith.constant 0 : i32
    %11 = arith.cmpi ne, %10, %c0_i32_9 : i32
    scf.if %11 {
      %c0_10 = arith.constant 0 : index
      %c0_11 = arith.constant 0 : index
      %12 = vector.load %arg7[%c0_10, %c0_11] : memref<32x128xf32, #tpu.memory_space<vmem>>, vector<32x128xf32>
      %c0_12 = arith.constant 0 : index
      %c0_13 = arith.constant 0 : index
      %13 = vector.load %arg5[%c0_12, %c0_13] : memref<1x128xf32, #tpu.memory_space<vmem>>, vector<1x128xf32>
      %14 = vector.broadcast %13 : vector<1x128xf32> to vector<32x128xf32>
      %15 = arith.addf %12, %14 : vector<32x128xf32>
      %cst_14 = arith.constant 0.000000e+00 : f32
      %16 = vector.broadcast %cst_14 : f32 to vector<32x128xf32>
      %17 = arith.maximumf %15, %16 : vector<32x128xf32>
      %c0_15 = arith.constant 0 : index
      %c0_16 = arith.constant 0 : index
      %18 = vector.load %arg6[%c0_15, %c0_16] : memref<32x128xf32, #tpu.memory_space<vmem>>, vector<32x128xf32>
      tpu.vector_store %arg6[%c0_15, %c0_16], %17 {strides = array<i32>} : memref<32x128xf32, #tpu.memory_space<vmem>>, vector<32x128xf32>,
    } else {
    }
    return
  }
  func.func @transform_0(%arg0: i32, %arg1: i32, %arg2: i32) -> (i32, i32) {
    %c0_i32 = arith.constant 0 : i32
    return %arg0, %arg2 : i32, i32
  }
  func.func @transform_1(%arg0: i32, %arg1: i32, %arg2: i32) -> (i32, i32) {
    %c0_i32 = arith.constant 0 : i32
    return %arg2, %arg1 : i32, i32
  }
  func.func @transform_2(%arg0: i32, %arg1: i32, %arg2: i32) -> (i32, i32) {
    %c0_i32 = arith.constant 0 : i32
    %c0_i32_0 = arith.constant 0 : i32
    return %c0_i32, %arg1 : i32, i32
  }
  func.func @transform_3(%arg0: i32, %arg1: i32, %arg2: i32) -> (i32, i32) {
    %c0_i32 = arith.constant 0 : i32
    return %arg0, %arg1 : i32, i32
  }
}

module attributes {stable_mosaic.version = 11 : i64} {
  func.func @_mean_points_kernel(%arg0: i32, %arg1: memref<2x16x64xf32, #tpu.memory_space<vmem>>, %arg2: memref<2x64xf32, #tpu.memory_space<vmem>>, %arg3: memref<2x64xf32, #tpu.memory_space<vmem>>) attributes {dimension_semantics = [#tpu.dimension_semantics<arbitrary>], iteration_bounds = array<i64: 1>, scalar_prefetch = 0 : i64, scratch_operands = 1 : i64, tpu.core_type = #tpu.core_type<tc>, window_params = [{transform_indices = @transform_0, window_bounds = array<i64: 2, 16, 64>}, {pipeline_mode = #tpu.pipeline_mode<synchronous>, transform_indices = @transform_1, window_bounds = array<i64: 2, 64>}]} {
    %c0_i32 = arith.constant 0 : i32
    %0 = arith.cmpi eq, %arg0, %c0_i32 : i32
    %1 = arith.extui %0 : i1 to i32
    %c0_i32_0 = arith.constant 0 : i32
    %2 = arith.cmpi ne, %1, %c0_i32_0 : i32
    scf.if %2 {
      %cst_9 = arith.constant 0.000000e+00 : f32
      %11 = vector.broadcast %cst_9 : f32 to vector<2x64xf32>
      %c0_10 = arith.constant 0 : index
      %c0_11 = arith.constant 0 : index
      %12 = vector.load %arg3[%c0_10, %c0_11] : memref<2x64xf32, #tpu.memory_space<vmem>>, vector<2x64xf32>
      tpu.vector_store %arg3[%c0_10, %c0_11], %11 {strides = array<i32>} : memref<2x64xf32, #tpu.memory_space<vmem>>, vector<2x64xf32>,
    } else {
    }
    %c0 = arith.constant 0 : index
    %c0_1 = arith.constant 0 : index
    %3 = vector.load %arg3[%c0, %c0_1] : memref<2x64xf32, #tpu.memory_space<vmem>>, vector<2x64xf32>
    %c0_2 = arith.constant 0 : index
    %c0_3 = arith.constant 0 : index
    %c0_4 = arith.constant 0 : index
    %4 = vector.load %arg1[%c0_2, %c0_3, %c0_4] : memref<2x16x64xf32, #tpu.memory_space<vmem>>, vector<2x16x64xf32>
    %cst = arith.constant dense<0.000000e+00> : vector<2x64xf32>
    %5 = vector.multi_reduction <add>, %4, %cst [1] : vector<2x16x64xf32> to vector<2x64xf32>
    %6 = arith.addf %3, %5 : vector<2x64xf32>
    %c0_5 = arith.constant 0 : index
    %c0_6 = arith.constant 0 : index
    %7 = vector.load %arg3[%c0_5, %c0_6] : memref<2x64xf32, #tpu.memory_space<vmem>>, vector<2x64xf32>
    tpu.vector_store %arg3[%c0_5, %c0_6], %6 {strides = array<i32>} : memref<2x64xf32, #tpu.memory_space<vmem>>, vector<2x64xf32>,
    %c0_i32_7 = arith.constant 0 : i32
    %8 = arith.cmpi eq, %arg0, %c0_i32_7 : i32
    %9 = arith.extui %8 : i1 to i32
    %c0_i32_8 = arith.constant 0 : i32
    %10 = arith.cmpi ne, %9, %c0_i32_8 : i32
    scf.if %10 {
      %c0_9 = arith.constant 0 : index
      %c0_10 = arith.constant 0 : index
      %11 = vector.load %arg3[%c0_9, %c0_10] : memref<2x64xf32, #tpu.memory_space<vmem>>, vector<2x64xf32>
      %cst_11 = arith.constant 6.250000e-02 : f32
      %12 = vector.broadcast %cst_11 : f32 to vector<2x64xf32>
      %13 = arith.mulf %11, %12 : vector<2x64xf32>
      %c0_12 = arith.constant 0 : index
      %c0_13 = arith.constant 0 : index
      %14 = vector.load %arg2[%c0_12, %c0_13] : memref<2x64xf32, #tpu.memory_space<vmem>>, vector<2x64xf32>
      tpu.vector_store %arg2[%c0_12, %c0_13], %13 {strides = array<i32>} : memref<2x64xf32, #tpu.memory_space<vmem>>, vector<2x64xf32>,
    } else {
    }
    return
  }
  func.func @transform_0(%arg0: i32) -> (i32, i32, i32) {
    %c0_i32 = arith.constant 0 : i32
    %c0_i32_0 = arith.constant 0 : i32
    %c0_i32_1 = arith.constant 0 : i32
    return %c0_i32, %arg0, %c0_i32_0 : i32, i32, i32
  }
  func.func @transform_1(%arg0: i32) -> (i32, i32) {
    %c0_i32 = arith.constant 0 : i32
    %c0_i32_0 = arith.constant 0 : i32
    %c0_i32_1 = arith.constant 0 : i32
    return %c0_i32, %c0_i32_0 : i32, i32
  }
}

module attributes {stable_mosaic.version = 11 : i64} {
  func.func @_matmul_bias_kernel(%arg0: i32, %arg1: i32, %arg2: i32, %arg3: memref<8x128xf32, #tpu.memory_space<vmem>>, %arg4: memref<128x128xf32, #tpu.memory_space<vmem>>, %arg5: memref<1x128xf32, #tpu.memory_space<vmem>>, %arg6: memref<8x128xf32, #tpu.memory_space<vmem>>, %arg7: memref<8x128xf32, #tpu.memory_space<vmem>>) attributes {dimension_semantics = [#tpu.dimension_semantics<parallel>, #tpu.dimension_semantics<parallel>, #tpu.dimension_semantics<arbitrary>], iteration_bounds = array<i64: 1, 1, 1>, scalar_prefetch = 0 : i64, scratch_operands = 1 : i64, tpu.core_type = #tpu.core_type<tc>, window_params = [{transform_indices = @transform_0, window_bounds = array<i64: 8, 128>}, {transform_indices = @transform_1, window_bounds = array<i64: 128, 128>}, {transform_indices = @transform_2, window_bounds = array<i64: 1, 128>}, {transform_indices = @transform_3, window_bounds = array<i64: 8, 128>}]} {
    %c0_i32 = arith.constant 0 : i32
    %0 = arith.cmpi eq, %arg2, %c0_i32 : i32
    %1 = arith.extui %0 : i1 to i32
    %c0_i32_0 = arith.constant 0 : i32
    %2 = arith.cmpi ne, %1, %c0_i32_0 : i32
    scf.if %2 {
      %cst_10 = arith.constant 0.000000e+00 : f32
      %12 = vector.broadcast %cst_10 : f32 to vector<8x128xf32>
      %c0_11 = arith.constant 0 : index
      %c0_12 = arith.constant 0 : index
      %13 = vector.load %arg7[%c0_11, %c0_12] : memref<8x128xf32, #tpu.memory_space<vmem>>, vector<8x128xf32>
      tpu.vector_store %arg7[%c0_11, %c0_12], %12 {strides = array<i32>} : memref<8x128xf32, #tpu.memory_space<vmem>>, vector<8x128xf32>,
    } else {
    }
    %c0 = arith.constant 0 : index
    %c0_1 = arith.constant 0 : index
    %3 = vector.load %arg7[%c0, %c0_1] : memref<8x128xf32, #tpu.memory_space<vmem>>, vector<8x128xf32>
    %c0_2 = arith.constant 0 : index
    %c0_3 = arith.constant 0 : index
    %4 = vector.load %arg3[%c0_2, %c0_3] : memref<8x128xf32, #tpu.memory_space<vmem>>, vector<8x128xf32>
    %c0_4 = arith.constant 0 : index
    %c0_5 = arith.constant 0 : index
    %5 = vector.load %arg4[%c0_4, %c0_5] : memref<128x128xf32, #tpu.memory_space<vmem>>, vector<128x128xf32>
    %cst = arith.constant dense<0.000000e+00> : vector<8x128xf32>
    %6 = tpu.matmul %4, %5, %cst {dimension_numbers = #tpu.dot_dimension_numbers<[1], [0], [0], [1], [0, 0, 1, 1], [], []>} : vector<8x128xf32>, vector<128x128xf32>, vector<8x128xf32> -> vector<8x128xf32>
    %7 = arith.addf %3, %6 : vector<8x128xf32>
    %c0_6 = arith.constant 0 : index
    %c0_7 = arith.constant 0 : index
    %8 = vector.load %arg7[%c0_6, %c0_7] : memref<8x128xf32, #tpu.memory_space<vmem>>, vector<8x128xf32>
    tpu.vector_store %arg7[%c0_6, %c0_7], %7 {strides = array<i32>} : memref<8x128xf32, #tpu.memory_space<vmem>>, vector<8x128xf32>,
    %c0_i32_8 = arith.constant 0 : i32
    %9 = arith.cmpi eq, %arg2, %c0_i32_8 : i32
    %10 = arith.extui %9 : i1 to i32
    %c0_i32_9 = arith.constant 0 : i32
    %11 = arith.cmpi ne, %10, %c0_i32_9 : i32
    scf.if %11 {
      %c0_10 = arith.constant 0 : index
      %c0_11 = arith.constant 0 : index
      %12 = vector.load %arg7[%c0_10, %c0_11] : memref<8x128xf32, #tpu.memory_space<vmem>>, vector<8x128xf32>
      %c0_12 = arith.constant 0 : index
      %c0_13 = arith.constant 0 : index
      %13 = vector.load %arg5[%c0_12, %c0_13] : memref<1x128xf32, #tpu.memory_space<vmem>>, vector<1x128xf32>
      %14 = vector.broadcast %13 : vector<1x128xf32> to vector<8x128xf32>
      %15 = arith.addf %12, %14 : vector<8x128xf32>
      %cst_14 = arith.constant 0.000000e+00 : f32
      %16 = vector.broadcast %cst_14 : f32 to vector<8x128xf32>
      %17 = arith.maximumf %15, %16 : vector<8x128xf32>
      %c0_15 = arith.constant 0 : index
      %c0_16 = arith.constant 0 : index
      %18 = vector.load %arg6[%c0_15, %c0_16] : memref<8x128xf32, #tpu.memory_space<vmem>>, vector<8x128xf32>
      tpu.vector_store %arg6[%c0_15, %c0_16], %17 {strides = array<i32>} : memref<8x128xf32, #tpu.memory_space<vmem>>, vector<8x128xf32>,
    } else {
    }
    return
  }
  func.func @transform_0(%arg0: i32, %arg1: i32, %arg2: i32) -> (i32, i32) {
    %c0_i32 = arith.constant 0 : i32
    return %arg0, %arg2 : i32, i32
  }
  func.func @transform_1(%arg0: i32, %arg1: i32, %arg2: i32) -> (i32, i32) {
    %c0_i32 = arith.constant 0 : i32
    return %arg2, %arg1 : i32, i32
  }
  func.func @transform_2(%arg0: i32, %arg1: i32, %arg2: i32) -> (i32, i32) {
    %c0_i32 = arith.constant 0 : i32
    %c0_i32_0 = arith.constant 0 : i32
    return %c0_i32, %arg1 : i32, i32
  }
  func.func @transform_3(%arg0: i32, %arg1: i32, %arg2: i32) -> (i32, i32) {
    %c0_i32 = arith.constant 0 : i32
    return %arg0, %arg1 : i32, i32
  }
}

module attributes {stable_mosaic.version = 11 : i64} {
  func.func @_matmul_bias_kernel(%arg0: i32, %arg1: i32, %arg2: i32, %arg3: memref<8x128xf32, #tpu.memory_space<vmem>>, %arg4: memref<128x128xf32, #tpu.memory_space<vmem>>, %arg5: memref<1x128xf32, #tpu.memory_space<vmem>>, %arg6: memref<8x128xf32, #tpu.memory_space<vmem>>, %arg7: memref<8x128xf32, #tpu.memory_space<vmem>>) attributes {dimension_semantics = [#tpu.dimension_semantics<parallel>, #tpu.dimension_semantics<parallel>, #tpu.dimension_semantics<arbitrary>], iteration_bounds = array<i64: 1, 1, 1>, scalar_prefetch = 0 : i64, scratch_operands = 1 : i64, tpu.core_type = #tpu.core_type<tc>, window_params = [{transform_indices = @transform_0, window_bounds = array<i64: 8, 128>}, {transform_indices = @transform_1, window_bounds = array<i64: 128, 128>}, {transform_indices = @transform_2, window_bounds = array<i64: 1, 128>}, {transform_indices = @transform_3, window_bounds = array<i64: 8, 128>}]} {
    %c0_i32 = arith.constant 0 : i32
    %0 = arith.cmpi eq, %arg2, %c0_i32 : i32
    %1 = arith.extui %0 : i1 to i32
    %c0_i32_0 = arith.constant 0 : i32
    %2 = arith.cmpi ne, %1, %c0_i32_0 : i32
    scf.if %2 {
      %cst_10 = arith.constant 0.000000e+00 : f32
      %12 = vector.broadcast %cst_10 : f32 to vector<8x128xf32>
      %c0_11 = arith.constant 0 : index
      %c0_12 = arith.constant 0 : index
      %13 = vector.load %arg7[%c0_11, %c0_12] : memref<8x128xf32, #tpu.memory_space<vmem>>, vector<8x128xf32>
      tpu.vector_store %arg7[%c0_11, %c0_12], %12 {strides = array<i32>} : memref<8x128xf32, #tpu.memory_space<vmem>>, vector<8x128xf32>,
    } else {
    }
    %c0 = arith.constant 0 : index
    %c0_1 = arith.constant 0 : index
    %3 = vector.load %arg7[%c0, %c0_1] : memref<8x128xf32, #tpu.memory_space<vmem>>, vector<8x128xf32>
    %c0_2 = arith.constant 0 : index
    %c0_3 = arith.constant 0 : index
    %4 = vector.load %arg3[%c0_2, %c0_3] : memref<8x128xf32, #tpu.memory_space<vmem>>, vector<8x128xf32>
    %c0_4 = arith.constant 0 : index
    %c0_5 = arith.constant 0 : index
    %5 = vector.load %arg4[%c0_4, %c0_5] : memref<128x128xf32, #tpu.memory_space<vmem>>, vector<128x128xf32>
    %cst = arith.constant dense<0.000000e+00> : vector<8x128xf32>
    %6 = tpu.matmul %4, %5, %cst {dimension_numbers = #tpu.dot_dimension_numbers<[1], [0], [0], [1], [0, 0, 1, 1], [], []>} : vector<8x128xf32>, vector<128x128xf32>, vector<8x128xf32> -> vector<8x128xf32>
    %7 = arith.addf %3, %6 : vector<8x128xf32>
    %c0_6 = arith.constant 0 : index
    %c0_7 = arith.constant 0 : index
    %8 = vector.load %arg7[%c0_6, %c0_7] : memref<8x128xf32, #tpu.memory_space<vmem>>, vector<8x128xf32>
    tpu.vector_store %arg7[%c0_6, %c0_7], %7 {strides = array<i32>} : memref<8x128xf32, #tpu.memory_space<vmem>>, vector<8x128xf32>,
    %c0_i32_8 = arith.constant 0 : i32
    %9 = arith.cmpi eq, %arg2, %c0_i32_8 : i32
    %10 = arith.extui %9 : i1 to i32
    %c0_i32_9 = arith.constant 0 : i32
    %11 = arith.cmpi ne, %10, %c0_i32_9 : i32
    scf.if %11 {
      %c0_10 = arith.constant 0 : index
      %c0_11 = arith.constant 0 : index
      %12 = vector.load %arg7[%c0_10, %c0_11] : memref<8x128xf32, #tpu.memory_space<vmem>>, vector<8x128xf32>
      %c0_12 = arith.constant 0 : index
      %c0_13 = arith.constant 0 : index
      %13 = vector.load %arg5[%c0_12, %c0_13] : memref<1x128xf32, #tpu.memory_space<vmem>>, vector<1x128xf32>
      %14 = vector.broadcast %13 : vector<1x128xf32> to vector<8x128xf32>
      %15 = arith.addf %12, %14 : vector<8x128xf32>
      %c0_14 = arith.constant 0 : index
      %c0_15 = arith.constant 0 : index
      %16 = vector.load %arg6[%c0_14, %c0_15] : memref<8x128xf32, #tpu.memory_space<vmem>>, vector<8x128xf32>
      tpu.vector_store %arg6[%c0_14, %c0_15], %15 {strides = array<i32>} : memref<8x128xf32, #tpu.memory_space<vmem>>, vector<8x128xf32>,
    } else {
    }
    return
  }
  func.func @transform_0(%arg0: i32, %arg1: i32, %arg2: i32) -> (i32, i32) {
    %c0_i32 = arith.constant 0 : i32
    return %arg0, %arg2 : i32, i32
  }
  func.func @transform_1(%arg0: i32, %arg1: i32, %arg2: i32) -> (i32, i32) {
    %c0_i32 = arith.constant 0 : i32
    return %arg2, %arg1 : i32, i32
  }
  func.func @transform_2(%arg0: i32, %arg1: i32, %arg2: i32) -> (i32, i32) {
    %c0_i32 = arith.constant 0 : i32
    %c0_i32_0 = arith.constant 0 : i32
    return %c0_i32, %arg1 : i32, i32
  }
  func.func @transform_3(%arg0: i32, %arg1: i32, %arg2: i32) -> (i32, i32) {
    %c0_i32 = arith.constant 0 : i32
    return %arg0, %arg1 : i32, i32
  }
}

</mosaic_0001>

<llo_original>
// kernel: energy_point_residual_forward.9
$region0: #{energy_point_residual_forward.9}
  #allocation0 [shape = 'u32[]', space=smem, size = 0x4, offset = 0x4, fixed_abs, tag = 'smem constant byte address 0x4 - core index']
  #allocation1 [shape = 'u32[144,128]{1,0:T(1,128)}', space=vmem, size = 0x12000, scoped, tag = 'internal scratch']
  #allocation2 [shape = 'f32[8,128]{1,0:T(8,128)}', space=vmem, size = 0x1000, scoped, tag = 'scratch operand']
  %s0 = inlined_call_operand.vmem [shape: f32[8,128], index: 0, kind: input, shape index: {}]
  %s1 = inlined_call_operand.vmem [shape: f32[128,128], index: 1, kind: input, shape index: {}]
  %s2 = inlined_call_operand.vmem [shape: f32[1,128], index: 2, kind: input, shape index: {}]
  %s3 = inlined_call_operand.vmem [shape: f32[8,128], index: 3, kind: output, shape index: {}]
  %s4 = sld [smem:[#allocation0]]
  $region30: #{energy_point_residual_forward.9} parent=0
    _
  %s6 = ssub.s32 1, %s4
  %s7 = scalar_select 0, %s6, %s4
  // Predicated region
  $region2: #{energy_point_residual_forward.9} parent=0 // pred_check
    _
  $region3: #{energy_point_residual_forward.9} parent=0 // pred_check_branch
    %9 = sbr.rel (0) target = $region5
  $region4: #{energy_point_residual_forward.9} parent=0 // pred_region
    _
  $region5: #{energy_point_residual_forward.9} parent=0 // pred_fallthru
    _
  // Predicated region
  $region6: #{energy_point_residual_forward.9} parent=0 // pred_check
    _
  $region7: #{energy_point_residual_forward.9} parent=0 // pred_check_branch
    %11 = sbr.rel (0) target = $region9
  $region8: #{energy_point_residual_forward.9} parent=0 // pred_region
    _
  $region9: #{energy_point_residual_forward.9} parent=0 // pred_fallthru
    _
  // Predicated region
  $region10: #{energy_point_residual_forward.9} parent=0 // pred_check
    _
  $region11: #{energy_point_residual_forward.9} parent=0 // pred_check_branch
    %13 = sbr.rel (0) target = $region13
  $region12: #{energy_point_residual_forward.9} parent=0 // pred_region
    _
  $region13: #{energy_point_residual_forward.9} parent=0 // pred_fallthru
    _
  %p14 = scmp.eq.s32.totalorder 0, 0
  // Predicated region
  $region14: #{energy_point_residual_forward.9} parent=0 // pred_check
    %p15 = pneg %p14
  $region15: #{energy_point_residual_forward.9} parent=0 // pred_check_branch
    %17 = sbr.rel (%p15) target = $region17
  $region16: #{energy_point_residual_forward.9} parent=0 // pred_region
    %18 = vst [vmem:[#allocation2] sm:$0xff] 0.0
  $region17: #{energy_point_residual_forward.9} parent=0 // pred_fallthru
    _
  %v19 = vld [vmem:[#allocation2] sm:$0xff]
  %v20 = vld [vmem:[%s0] sm:$0xff]
  %v21 = vld [vmem:[%s1] sm:$0xff]
  %v22 = vld [vmem:[%s1 + $0x8] sm:$0xff]
  %v23 = vld [vmem:[%s1 + $0x10] sm:$0xff]
  %v24 = vld [vmem:[%s1 + $0x18] sm:$0xff]
  %v25 = vld [vmem:[%s1 + $0x20] sm:$0xff]
  %v26 = vld [vmem:[%s1 + $0x28] sm:$0xff]
  %v27 = vld [vmem:[%s1 + $0x30] sm:$0xff]
  %v28 = vld [vmem:[%s1 + $0x38] sm:$0xff]
  %v29 = vld [vmem:[%s1 + $0x40] sm:$0xff]
  %v30 = vld [vmem:[%s1 + $0x48] sm:$0xff]
  %v31 = vld [vmem:[%s1 + $0x50] sm:$0xff]
  %v32 = vld [vmem:[%s1 + $0x58] sm:$0xff]
  %v33 = vld [vmem:[%s1 + $0x60] sm:$0xff]
  %v34 = vld [vmem:[%s1 + $0x68] sm:$0xff]
  %v35 = vld [vmem:[%s1 + $0x70] sm:$0xff]
  %v36 = vld [vmem:[%s1 + $0x78] sm:$0xff]
  %37 = vmatprep.subr.mxu0 0.0
  %38 = vmatpush1.msra.mxu0 %v21
  %39 = vmatprep.subr.mxu0 0.0
  %40 = vmatpush1.msra.mxu0 %v22
  %41 = vmatprep.subr.mxu0 0.0
  %42 = vmatpush1.msra.mxu0 %v23
  %43 = vmatprep.subr.mxu0 0.0
  %44 = vmatpush1.msra.mxu0 %v24
  %45 = vmatprep.subr.mxu0 0.0
  %46 = vmatpush1.msra.mxu0 %v25
  %47 = vmatprep.subr.mxu0 0.0
  %48 = vmatpush1.msra.mxu0 %v26
  %49 = vmatprep.subr.mxu0 0.0
  %50 = vmatpush1.msra.mxu0 %v27
  %51 = vmatprep.subr.mxu0 0.0
  %52 = vmatpush1.msra.mxu0 %v28
  %53 = vmatprep.subr.mxu0 0.0
  %54 = vmatpush1.msra.mxu0 %v29
  %55 = vmatprep.subr.mxu0 0.0
  %56 = vmatpush1.msra.mxu0 %v30
  %57 = vmatprep.subr.mxu0 0.0
  %58 = vmatpush1.msra.mxu0 %v31
  %59 = vmatprep.subr.mxu0 0.0
  %60 = vmatpush1.msra.mxu0 %v32
  %61 = vmatprep.subr.mxu0 0.0
  %62 = vmatpush1.msra.mxu0 %v33
  %63 = vmatprep.subr.mxu0 0.0
  %64 = vmatpush1.msra.mxu0 %v34
  %65 = vmatprep.subr.mxu0 0.0
  %66 = vmatpush1.msra.mxu0 %v35
  %67 = vmatprep.subr.mxu0 0.0
  %68 = vmatpush1.msra.mxu0 %v36
  %69 = vmatprep.subr.mxu0 0.0
  %70 = vmatpush1.msra.mxu0 0.0
  %71 = vmatprep.subr.mxu0 0.0
  %72 = vmatpush1.msra.mxu0 0.0
  %73 = vmatprep.subr.mxu0 0.0
  %74 = vmatpush1.msra.mxu0 0.0
  %75 = vmatprep.subr.mxu0 0.0
  %76 = vmatpush1.msra.mxu0 0.0
  %77 = vmatprep.subr.mxu0 0.0
  %78 = vmatpush1.msra.mxu0 0.0
  %79 = vmatprep.subr.mxu0 0.0
  %80 = vmatpush1.msra.mxu0 0.0
  %81 = vmatprep.subr.mxu0 0.0
  %82 = vmatpush1.msra.mxu0 0.0
  %83 = vmatprep.subr.mxu0 0.0
  %84 = vmatpush1.msra.mxu0 0.0
  %85 = vmatprep.subr.mxu0 0.0
  %86 = vmatpush1.msra.mxu0 0.0
  %87 = vmatprep.subr.mxu0 0.0
  %88 = vmatpush1.msra.mxu0 0.0
  %89 = vmatprep.subr.mxu0 0.0
  %90 = vmatpush1.msra.mxu0 0.0
  %91 = vmatprep.subr.mxu0 0.0
  %92 = vmatpush1.msra.mxu0 0.0
  %93 = vmatprep.subr.mxu0 0.0
  %94 = vmatpush1.msra.mxu0 0.0
  %95 = vmatprep.subr.mxu0 0.0
  %96 = vmatpush1.msra.mxu0 0.0
  %97 = vmatprep.subr.mxu0 0.0
  %98 = vmatpush1.msra.mxu0 0.0
  %99 = vmatprep.subr.mxu0 0.0
  %100 = vmatpush1.msra.mxu0 0.0
  %101 = vmatprep.mubr.f32.mxu0 0.0
  %102 = vmatmul.mubr.f32.gmra.mrb[0].mxu0 %v20
  %v103 = vpop.f32.mrb[0].mxu0
  %v104 = vadd.f32 0.0, %v103
  %v105 = vpop.f32.mrb[0].mxu0
  %106 = vdwg.mxu0
  %v107 = vadd.f32 %v19, %v104
  %108 = vst [vmem:[#allocation2] sm:$0xff] %v107
  // Predicated region
  $region18: #{energy_point_residual_forward.9} parent=0 // pred_check
    %p109 = pneg %p14
  $region19: #{energy_point_residual_forward.9} parent=0 // pred_check_branch
    %111 = sbr.rel (%p109) target = $region21
  $region20: #{energy_point_residual_forward.9} parent=0 // pred_region
    %v112 = vld [vmem:[#allocation2] sm:$0xff]
    %v113 = vld [vmem:[%s2] sm:$0x1]
    %v115 = vlaneseq
    %v116 = vshrl.u32 %v115, 7
    %v117 = vsub.s32 0, %v116
    %v118 = vrot.slane %v113, %v117
    %v120 = vadd.f32 %v112, %v118
    %v121 = vmax.f32 %v120, 0.0
    %122 = vst [vmem:[%s3] sm:$0xff] %v121
  $region21: #{energy_point_residual_forward.9} parent=0 // pred_fallthru
    _
  // Predicated region
  $region22: #{energy_point_residual_forward.9} parent=0 // pred_check
    _
  $region23: #{energy_point_residual_forward.9} parent=0 // pred_check_branch
    %124 = sbr.rel (0) target = $region25
  $region24: #{energy_point_residual_forward.9} parent=0 // pred_region
    _
  $region25: #{energy_point_residual_forward.9} parent=0 // pred_fallthru
    _
  // Predicated region
  $region26: #{energy_point_residual_forward.9} parent=0 // pred_check
    _
  $region27: #{energy_point_residual_forward.9} parent=0 // pred_check_branch
    %126 = sbr.rel (0) target = $region29
  $region28: #{energy_point_residual_forward.9} parent=0 // pred_region
    _
  $region29: #{energy_point_residual_forward.9} parent=0 // pred_fallthru
    _

// kernel: energy_point_residual_forward.8
$region0: #{energy_point_residual_forward.8}
  #allocation0 [shape = 'u32[]', space=smem, size = 0x4, offset = 0x4, fixed_abs, tag = 'smem constant byte address 0x4 - core index']
  #allocation1 [shape = 'u32[144,128]{1,0:T(1,128)}', space=vmem, size = 0x12000, scoped, tag = 'internal scratch']
  #allocation2 [shape = 'f32[2,64]{1,0:T(2,128)}', space=vmem, size = 0x400, scoped, tag = 'scratch operand']
  %s0 = inlined_call_operand.vmem [shape: f32[2,16,64], index: 0, kind: input, shape index: {}]
  %s1 = inlined_call_operand.vmem [shape: f32[2,64], index: 1, kind: output, shape index: {}]
  %s2 = sld [smem:[#allocation0]]
  $region22: #{energy_point_residual_forward.8} parent=0
    _
  %s4 = ssub.s32 1, %s2
  %s5 = scalar_select 0, %s4, %s2
  // Predicated region
  $region2: #{energy_point_residual_forward.8} parent=0 // pred_check
    _
  $region3: #{energy_point_residual_forward.8} parent=0 // pred_check_branch
    %7 = sbr.rel (0) target = $region5
  $region4: #{energy_point_residual_forward.8} parent=0 // pred_region
    _
  $region5: #{energy_point_residual_forward.8} parent=0 // pred_fallthru
    _
  %p8 = scmp.eq.s32.totalorder 0, 0
  // Predicated region
  $region6: #{energy_point_residual_forward.8} parent=0 // pred_check
    %p9 = pneg %p8
  $region7: #{energy_point_residual_forward.8} parent=0 // pred_check_branch
    %11 = sbr.rel (%p9) target = $region9
  $region8: #{energy_point_residual_forward.8} parent=0 // pred_region
    %vm12 = vcmask 517120
    %13 = vst.msk [vmem:[#allocation2] sm:$0x3] %vm12, 0.0
  $region9: #{energy_point_residual_forward.8} parent=0 // pred_fallthru
    _
  %v14 = vld [vmem:[#allocation2] sm:$0x3]
  %v15 = vld [vmem:[%s0] sm:$0xff]
  %v16 = vld [vmem:[%s0 + $0x8] sm:$0xff]
  %v17 = vld [vmem:[%s0 + $0x10] sm:$0xff]
  %v18 = vld [vmem:[%s0 + $0x18] sm:$0xff]
  %vm19 = vcmask 523264
  %v20 = vsel %vm19, %v15, 0.0
  %v21 = vsel %vm19, %v16, 0.0
  %v22 = vadd.f32 %v20, %v21
  %v23 = vrot.slane %v22, 4
  %v24 = vadd.f32 %v22, %v23
  %v25 = vrot.slane %v24, 2
  %v26 = vadd.f32 %v24, %v25
  %v27 = vrot.slane %v26, 1
  %v28 = vadd.f32 %v26, %v27
  %v29 = vsel %vm19, %v17, 0.0
  %v30 = vsel %vm19, %v18, 0.0
  %v31 = vadd.f32 %v29, %v30
  %v32 = vrot.slane %v31, 4
  %v33 = vadd.f32 %v31, %v32
  %v34 = vrot.slane %v33, 2
  %v35 = vadd.f32 %v33, %v34
  %v36 = vrot.slane %v35, 1
  %v37 = vadd.f32 %v35, %v36
  %vm40 = vcmask 1041409
  %v41 = vsel %vm40, %v37, %v28
  %v43 = vadd.f32 %v14, %v41
  %vm44 = vcmask 517120
  %45 = vst.msk [vmem:[#allocation2] sm:$0x3] %vm44, %v43
  // Predicated region
  $region10: #{energy_point_residual_forward.8} parent=0 // pred_check
    %p46 = pneg %p8
  $region11: #{energy_point_residual_forward.8} parent=0 // pred_check_branch
    %48 = sbr.rel (%p46) target = $region13
  $region12: #{energy_point_residual_forward.8} parent=0 // pred_region
    %v49 = vld [vmem:[#allocation2] sm:$0x3]
    %v50 = vmul.f32 %v49, 0.0625
    %51 = vst.msk [vmem:[%s1] sm:$0x3] %vm44, %v50
  $region13: #{energy_point_residual_forward.8} parent=0 // pred_fallthru
    _
  // Predicated region
  $region14: #{energy_point_residual_forward.8} parent=0 // pred_check
    _
  $region15: #{energy_point_residual_forward.8} parent=0 // pred_check_branch
    %53 = sbr.rel (0) target = $region17
  $region16: #{energy_point_residual_forward.8} parent=0 // pred_region
    _
  $region17: #{energy_point_residual_forward.8} parent=0 // pred_fallthru
    _
  // Predicated region
  $region18: #{energy_point_residual_forward.8} parent=0 // pred_check
    _
  $region19: #{energy_point_residual_forward.8} parent=0 // pred_check_branch
    %55 = sbr.rel (0) target = $region21
  $region20: #{energy_point_residual_forward.8} parent=0 // pred_region
    _
  $region21: #{energy_point_residual_forward.8} parent=0 // pred_fallthru
    _

// kernel: energy_point_residual_forward.6
$region0: #{energy_point_residual_forward.6}
  #allocation0 [shape = 'u32[]', space=smem, size = 0x4, offset = 0x4, fixed_abs, tag = 'smem constant byte address 0x4 - core index']
  #allocation1 [shape = 'u32[144,128]{1,0:T(1,128)}', space=vmem, size = 0x12000, scoped, tag = 'internal scratch']
  #allocation2 [shape = 'f32[32,128]{1,0:T(8,128)}', space=vmem, size = 0x4000, scoped, tag = 'scratch operand']
  %s0 = inlined_call_operand.vmem [shape: f32[32,128], index: 0, kind: input, shape index: {}]
  %s1 = inlined_call_operand.vmem [shape: f32[128,128], index: 1, kind: input, shape index: {}]
  %s2 = inlined_call_operand.vmem [shape: f32[1,128], index: 2, kind: input, shape index: {}]
  %s3 = inlined_call_operand.vmem [shape: f32[32,128], index: 3, kind: output, shape index: {}]
  %s4 = sld [smem:[#allocation0]]
  $region30: #{energy_point_residual_forward.6} parent=0
    _
  %s6 = ssub.s32 1, %s4
  %s7 = scalar_select 0, %s6, %s4
  // Predicated region
  $region2: #{energy_point_residual_forward.6} parent=0 // pred_check
    _
  $region3: #{energy_point_residual_forward.6} parent=0 // pred_check_branch
    %9 = sbr.rel (0) target = $region5
  $region4: #{energy_point_residual_forward.6} parent=0 // pred_region
    _
  $region5: #{energy_point_residual_forward.6} parent=0 // pred_fallthru
    _
  // Predicated region
  $region6: #{energy_point_residual_forward.6} parent=0 // pred_check
    _
  $region7: #{energy_point_residual_forward.6} parent=0 // pred_check_branch
    %11 = sbr.rel (0) target = $region9
  $region8: #{energy_point_residual_forward.6} parent=0 // pred_region
    _
  $region9: #{energy_point_residual_forward.6} parent=0 // pred_fallthru
    _
  // Predicated region
  $region10: #{energy_point_residual_forward.6} parent=0 // pred_check
    _
  $region11: #{energy_point_residual_forward.6} parent=0 // pred_check_branch
    %13 = sbr.rel (0) target = $region13
  $region12: #{energy_point_residual_forward.6} parent=0 // pred_region
    _
  $region13: #{energy_point_residual_forward.6} parent=0 // pred_fallthru
    _
  %p14 = scmp.eq.s32.totalorder 0, 0
  // Predicated region
  $region14: #{energy_point_residual_forward.6} parent=0 // pred_check
    %p15 = pneg %p14
  $region15: #{energy_point_residual_forward.6} parent=0 // pred_check_branch
    %17 = sbr.rel (%p15) target = $region17
  $region16: #{energy_point_residual_forward.6} parent=0 // pred_region
    %18 = vst [vmem:[#allocation2] sm:$0xff] 0.0
    %19 = vst [vmem:[#allocation2 + $0x8] sm:$0xff] 0.0
    %20 = vst [vmem:[#allocation2 + $0x10] sm:$0xff] 0.0
    %21 = vst [vmem:[#allocation2 + $0x18] sm:$0xff] 0.0
  $region17: #{energy_point_residual_forward.6} parent=0 // pred_fallthru
    _
  %v22 = vld [vmem:[#allocation2] sm:$0xff]
  %v23 = vld [vmem:[#allocation2 + $0x8] sm:$0xff]
  %v24 = vld [vmem:[#allocation2 + $0x10] sm:$0xff]
  %v25 = vld [vmem:[#allocation2 + $0x18] sm:$0xff]
  %v26 = vld [vmem:[%s0] sm:$0xff]
  %v27 = vld [vmem:[%s0 + $0x8] sm:$0xff]
  %v28 = vld [vmem:[%s0 + $0x10] sm:$0xff]
  %v29 = vld [vmem:[%s0 + $0x18] sm:$0xff]
  %v30 = vld [vmem:[%s1] sm:$0xff]
  %v31 = vld [vmem:[%s1 + $0x8] sm:$0xff]
  %v32 = vld [vmem:[%s1 + $0x10] sm:$0xff]
  %v33 = vld [vmem:[%s1 + $0x18] sm:$0xff]
  %v34 = vld [vmem:[%s1 + $0x20] sm:$0xff]
  %v35 = vld [vmem:[%s1 + $0x28] sm:$0xff]
  %v36 = vld [vmem:[%s1 + $0x30] sm:$0xff]
  %v37 = vld [vmem:[%s1 + $0x38] sm:$0xff]
  %v38 = vld [vmem:[%s1 + $0x40] sm:$0xff]
  %v39 = vld [vmem:[%s1 + $0x48] sm:$0xff]
  %v40 = vld [vmem:[%s1 + $0x50] sm:$0xff]
  %v41 = vld [vmem:[%s1 + $0x58] sm:$0xff]
  %v42 = vld [vmem:[%s1 + $0x60] sm:$0xff]
  %v43 = vld [vmem:[%s1 + $0x68] sm:$0xff]
  %v44 = vld [vmem:[%s1 + $0x70] sm:$0xff]
  %v45 = vld [vmem:[%s1 + $0x78] sm:$0xff]
  %46 = vmatprep.subr.mxu0 0.0
  %47 = vmatpush1.msra.mxu0 %v30
  %48 = vmatprep.subr.mxu0 0.0
  %49 = vmatpush1.msra.mxu0 %v31
  %50 = vmatprep.subr.mxu0 0.0
  %51 = vmatpush1.msra.mxu0 %v32
  %52 = vmatprep.subr.mxu0 0.0
  %53 = vmatpush1.msra.mxu0 %v33
  %54 = vmatprep.subr.mxu0 0.0
  %55 = vmatpush1.msra.mxu0 %v34
  %56 = vmatprep.subr.mxu0 0.0
  %57 = vmatpush1.msra.mxu0 %v35
  %58 = vmatprep.subr.mxu0 0.0
  %59 = vmatpush1.msra.mxu0 %v36
  %60 = vmatprep.subr.mxu0 0.0
  %61 = vmatpush1.msra.mxu0 %v37
  %62 = vmatprep.subr.mxu0 0.0
  %63 = vmatpush1.msra.mxu0 %v38
  %64 = vmatprep.subr.mxu0 0.0
  %65 = vmatpush1.msra.mxu0 %v39
  %66 = vmatprep.subr.mxu0 0.0
  %67 = vmatpush1.msra.mxu0 %v40
  %68 = vmatprep.subr.mxu0 0.0
  %69 = vmatpush1.msra.mxu0 %v41
  %70 = vmatprep.subr.mxu0 0.0
  %71 = vmatpush1.msra.mxu0 %v42
  %72 = vmatprep.subr.mxu0 0.0
  %73 = vmatpush1.msra.mxu0 %v43
  %74 = vmatprep.subr.mxu0 0.0
  %75 = vmatpush1.msra.mxu0 %v44
  %76 = vmatprep.subr.mxu0 0.0
  %77 = vmatpush1.msra.mxu0 %v45
  %78 = vmatprep.subr.mxu0 0.0
  %79 = vmatpush1.msra.mxu0 0.0
  %80 = vmatprep.subr.mxu0 0.0
  %81 = vmatpush1.msra.mxu0 0.0
  %82 = vmatprep.subr.mxu0 0.0
  %83 = vmatpush1.msra.mxu0 0.0
  %84 = vmatprep.subr.mxu0 0.0
  %85 = vmatpush1.msra.mxu0 0.0
  %86 = vmatprep.subr.mxu0 0.0
  %87 = vmatpush1.msra.mxu0 0.0
  %88 = vmatprep.subr.mxu0 0.0
  %89 = vmatpush1.msra.mxu0 0.0
  %90 = vmatprep.subr.mxu0 0.0
  %91 = vmatpush1.msra.mxu0 0.0
  %92 = vmatprep.subr.mxu0 0.0
  %93 = vmatpush1.msra.mxu0 0.0
  %94 = vmatprep.subr.mxu0 0.0
  %95 = vmatpush1.msra.mxu0 0.0
  %96 = vmatprep.subr.mxu0 0.0
  %97 = vmatpush1.msra.mxu0 0.0
  %98 = vmatprep.subr.mxu0 0.0
  %99 = vmatpush1.msra.mxu0 0.0
  %100 = vmatprep.subr.mxu0 0.0
  %101 = vmatpush1.msra.mxu0 0.0
  %102 = vmatprep.subr.mxu0 0.0
  %103 = vmatpush1.msra.mxu0 0.0
  %104 = vmatprep.subr.mxu0 0.0
  %105 = vmatpush1.msra.mxu0 0.0
  %106 = vmatprep.subr.mxu0 0.0
  %107 = vmatpush1.msra.mxu0 0.0
  %108 = vmatprep.subr.mxu0 0.0
  %109 = vmatpush1.msra.mxu0 0.0
  %110 = vmatprep.mubr.f32.mxu0 0.0
  %111 = vmatmul.mubr.f32.gmra.mrb[0].mxu0 %v26
  %v112 = vpop.f32.mrb[0].mxu0
  %v113 = vadd.f32 0.0, %v112
  %v114 = vpop.f32.mrb[0].mxu0
  %115 = vmatprep.mubr.f32.mxu0 0.0
  %116 = vmatmul.mubr.f32.gmra.mrb[0].mxu0 %v27
  %v117 = vpop.f32.mrb[0].mxu0
  %v118 = vadd.f32 0.0, %v117
  %v119 = vpop.f32.mrb[0].mxu0
  %120 = vmatprep.mubr.f32.mxu0 0.0
  %121 = vmatmul.mubr.f32.gmra.mrb[0].mxu0 %v28
  %v122 = vpop.f32.mrb[0].mxu0
  %v123 = vadd.f32 0.0, %v122
  %v124 = vpop.f32.mrb[0].mxu0
  %125 = vmatprep.mubr.f32.mxu0 0.0
  %126 = vmatmul.mubr.f32.gmra.mrb[0].mxu0 %v29
  %v127 = vpop.f32.mrb[0].mxu0
  %v128 = vadd.f32 0.0, %v127
  %v129 = vpop.f32.mrb[0].mxu0
  %130 = vdwg.mxu0
  %v131 = vadd.f32 %v22, %v113
  %v132 = vadd.f32 %v23, %v118
  %v133 = vadd.f32 %v24, %v123
  %v134 = vadd.f32 %v25, %v128
  %135 = vst [vmem:[#allocation2] sm:$0xff] %v131
  %136 = vst [vmem:[#allocation2 + $0x8] sm:$0xff] %v132
  %137 = vst [vmem:[#allocation2 + $0x10] sm:$0xff] %v133
  %138 = vst [vmem:[#allocation2 + $0x18] sm:$0xff] %v134
  // Predicated region
  $region18: #{energy_point_residual_forward.6} parent=0 // pred_check
    %p139 = pneg %p14
  $region19: #{energy_point_residual_forward.6} parent=0 // pred_check_branch
    %141 = sbr.rel (%p139) target = $region21
  $region20: #{energy_point_residual_forward.6} parent=0 // pred_region
    %v142 = vld [vmem:[#allocation2] sm:$0xff]
    %v143 = vld [vmem:[#allocation2 + $0x8] sm:$0xff]
    %v144 = vld [vmem:[#allocation2 + $0x10] sm:$0xff]
    %v145 = vld [vmem:[#allocation2 + $0x18] sm:$0xff]
    %v146 = vld [vmem:[%s2] sm:$0x1]
    %v148 = vlaneseq
    %v149 = vshrl.u32 %v148, 7
    %v150 = vsub.s32 0, %v149
    %v151 = vrot.slane %v146, %v150
    %v153 = vadd.f32 %v142, %v151
    %v154 = vadd.f32 %v143, %v151
    %v155 = vadd.f32 %v144, %v151
    %v156 = vadd.f32 %v145, %v151
    %v157 = vmax.f32 %v153, 0.0
    %v158 = vmax.f32 %v154, 0.0
    %v159 = vmax.f32 %v155, 0.0
    %v160 = vmax.f32 %v156, 0.0
    %161 = vst [vmem:[%s3] sm:$0xff] %v157
    %162 = vst [vmem:[%s3 + $0x8] sm:$0xff] %v158
    %163 = vst [vmem:[%s3 + $0x10] sm:$0xff] %v159
    %164 = vst [vmem:[%s3 + $0x18] sm:$0xff] %v160
  $region21: #{energy_point_residual_forward.6} parent=0 // pred_fallthru
    _
  // Predicated region
  $region22: #{energy_point_residual_forward.6} parent=0 // pred_check
    _
  $region23: #{energy_point_residual_forward.6} parent=0 // pred_check_branch
    %166 = sbr.rel (0) target = $region25
  $region24: #{energy_point_residual_forward.6} parent=0 // pred_region
    _
  $region25: #{energy_point_residual_forward.6} parent=0 // pred_fallthru
    _
  // Predicated region
  $region26: #{energy_point_residual_forward.6} parent=0 // pred_check
    _
  $region27: #{energy_point_residual_forward.6} parent=0 // pred_check_branch
    %168 = sbr.rel (0) target = $region29
  $region28: #{energy_point_residual_forward.6} parent=0 // pred_region
    _
  $region29: #{energy_point_residual_forward.6} parent=0 // pred_fallthru
    _

// kernel: energy_point_residual_forward.11
$region0: #{energy_point_residual_forward.11}
  #allocation0 [shape = 'u32[]', space=smem, size = 0x4, offset = 0x4, fixed_abs, tag = 'smem constant byte address 0x4 - core index']
  #allocation1 [shape = 'u32[144,128]{1,0:T(1,128)}', space=vmem, size = 0x12000, scoped, tag = 'internal scratch']
  #allocation2 [shape = 'f32[8,128]{1,0:T(8,128)}', space=vmem, size = 0x1000, scoped, tag = 'scratch operand']
  %s0 = inlined_call_operand.vmem [shape: f32[8,128], index: 0, kind: input, shape index: {}]
  %s1 = inlined_call_operand.vmem [shape: f32[128,128], index: 1, kind: input, shape index: {}]
  %s2 = inlined_call_operand.vmem [shape: f32[1,128], index: 2, kind: input, shape index: {}]
  %s3 = inlined_call_operand.vmem [shape: f32[8,128], index: 3, kind: output, shape index: {}]
  %s4 = sld [smem:[#allocation0]]
  $region30: #{energy_point_residual_forward.11} parent=0
    _
  %s6 = ssub.s32 1, %s4
  %s7 = scalar_select 0, %s6, %s4
  // Predicated region
  $region2: #{energy_point_residual_forward.11} parent=0 // pred_check
    _
  $region3: #{energy_point_residual_forward.11} parent=0 // pred_check_branch
    %9 = sbr.rel (0) target = $region5
  $region4: #{energy_point_residual_forward.11} parent=0 // pred_region
    _
  $region5: #{energy_point_residual_forward.11} parent=0 // pred_fallthru
    _
  // Predicated region
  $region6: #{energy_point_residual_forward.11} parent=0 // pred_check
    _
  $region7: #{energy_point_residual_forward.11} parent=0 // pred_check_branch
    %11 = sbr.rel (0) target = $region9
  $region8: #{energy_point_residual_forward.11} parent=0 // pred_region
    _
  $region9: #{energy_point_residual_forward.11} parent=0 // pred_fallthru
    _
  // Predicated region
  $region10: #{energy_point_residual_forward.11} parent=0 // pred_check
    _
  $region11: #{energy_point_residual_forward.11} parent=0 // pred_check_branch
    %13 = sbr.rel (0) target = $region13
  $region12: #{energy_point_residual_forward.11} parent=0 // pred_region
    _
  $region13: #{energy_point_residual_forward.11} parent=0 // pred_fallthru
    _
  %p14 = scmp.eq.s32.totalorder 0, 0
  // Predicated region
  $region14: #{energy_point_residual_forward.11} parent=0 // pred_check
    %p15 = pneg %p14
  $region15: #{energy_point_residual_forward.11} parent=0 // pred_check_branch
    %17 = sbr.rel (%p15) target = $region17
  $region16: #{energy_point_residual_forward.11} parent=0 // pred_region
    %18 = vst [vmem:[#allocation2] sm:$0xff] 0.0
  $region17: #{energy_point_residual_forward.11} parent=0 // pred_fallthru
    _
  %v19 = vld [vmem:[#allocation2] sm:$0xff]
  %v20 = vld [vmem:[%s0] sm:$0xff]
  %v21 = vld [vmem:[%s1] sm:$0xff]
  %v22 = vld [vmem:[%s1 + $0x8] sm:$0xff]
  %v23 = vld [vmem:[%s1 + $0x10] sm:$0xff]
  %v24 = vld [vmem:[%s1 + $0x18] sm:$0xff]
  %v25 = vld [vmem:[%s1 + $0x20] sm:$0xff]
  %v26 = vld [vmem:[%s1 + $0x28] sm:$0xff]
  %v27 = vld [vmem:[%s1 + $0x30] sm:$0xff]
  %v28 = vld [vmem:[%s1 + $0x38] sm:$0xff]
  %v29 = vld [vmem:[%s1 + $0x40] sm:$0xff]
  %v30 = vld [vmem:[%s1 + $0x48] sm:$0xff]
  %v31 = vld [vmem:[%s1 + $0x50] sm:$0xff]
  %v32 = vld [vmem:[%s1 + $0x58] sm:$0xff]
  %v33 = vld [vmem:[%s1 + $0x60] sm:$0xff]
  %v34 = vld [vmem:[%s1 + $0x68] sm:$0xff]
  %v35 = vld [vmem:[%s1 + $0x70] sm:$0xff]
  %v36 = vld [vmem:[%s1 + $0x78] sm:$0xff]
  %37 = vmatprep.subr.mxu0 0.0
  %38 = vmatpush1.msra.mxu0 %v21
  %39 = vmatprep.subr.mxu0 0.0
  %40 = vmatpush1.msra.mxu0 %v22
  %41 = vmatprep.subr.mxu0 0.0
  %42 = vmatpush1.msra.mxu0 %v23
  %43 = vmatprep.subr.mxu0 0.0
  %44 = vmatpush1.msra.mxu0 %v24
  %45 = vmatprep.subr.mxu0 0.0
  %46 = vmatpush1.msra.mxu0 %v25
  %47 = vmatprep.subr.mxu0 0.0
  %48 = vmatpush1.msra.mxu0 %v26
  %49 = vmatprep.subr.mxu0 0.0
  %50 = vmatpush1.msra.mxu0 %v27
  %51 = vmatprep.subr.mxu0 0.0
  %52 = vmatpush1.msra.mxu0 %v28
  %53 = vmatprep.subr.mxu0 0.0
  %54 = vmatpush1.msra.mxu0 %v29
  %55 = vmatprep.subr.mxu0 0.0
  %56 = vmatpush1.msra.mxu0 %v30
  %57 = vmatprep.subr.mxu0 0.0
  %58 = vmatpush1.msra.mxu0 %v31
  %59 = vmatprep.subr.mxu0 0.0
  %60 = vmatpush1.msra.mxu0 %v32
  %61 = vmatprep.subr.mxu0 0.0
  %62 = vmatpush1.msra.mxu0 %v33
  %63 = vmatprep.subr.mxu0 0.0
  %64 = vmatpush1.msra.mxu0 %v34
  %65 = vmatprep.subr.mxu0 0.0
  %66 = vmatpush1.msra.mxu0 %v35
  %67 = vmatprep.subr.mxu0 0.0
  %68 = vmatpush1.msra.mxu0 %v36
  %69 = vmatprep.subr.mxu0 0.0
  %70 = vmatpush1.msra.mxu0 0.0
  %71 = vmatprep.subr.mxu0 0.0
  %72 = vmatpush1.msra.mxu0 0.0
  %73 = vmatprep.subr.mxu0 0.0
  %74 = vmatpush1.msra.mxu0 0.0
  %75 = vmatprep.subr.mxu0 0.0
  %76 = vmatpush1.msra.mxu0 0.0
  %77 = vmatprep.subr.mxu0 0.0
  %78 = vmatpush1.msra.mxu0 0.0
  %79 = vmatprep.subr.mxu0 0.0
  %80 = vmatpush1.msra.mxu0 0.0
  %81 = vmatprep.subr.mxu0 0.0
  %82 = vmatpush1.msra.mxu0 0.0
  %83 = vmatprep.subr.mxu0 0.0
  %84 = vmatpush1.msra.mxu0 0.0
  %85 = vmatprep.subr.mxu0 0.0
  %86 = vmatpush1.msra.mxu0 0.0
  %87 = vmatprep.subr.mxu0 0.0
  %88 = vmatpush1.msra.mxu0 0.0
  %89 = vmatprep.subr.mxu0 0.0
  %90 = vmatpush1.msra.mxu0 0.0
  %91 = vmatprep.subr.mxu0 0.0
  %92 = vmatpush1.msra.mxu0 0.0
  %93 = vmatprep.subr.mxu0 0.0
  %94 = vmatpush1.msra.mxu0 0.0
  %95 = vmatprep.subr.mxu0 0.0
  %96 = vmatpush1.msra.mxu0 0.0
  %97 = vmatprep.subr.mxu0 0.0
  %98 = vmatpush1.msra.mxu0 0.0
  %99 = vmatprep.subr.mxu0 0.0
  %100 = vmatpush1.msra.mxu0 0.0
  %101 = vmatprep.mubr.f32.mxu0 0.0
  %102 = vmatmul.mubr.f32.gmra.mrb[0].mxu0 %v20
  %v103 = vpop.f32.mrb[0].mxu0
  %v104 = vadd.f32 0.0, %v103
  %v105 = vpop.f32.mrb[0].mxu0
  %106 = vdwg.mxu0
  %v107 = vadd.f32 %v19, %v104
  %108 = vst [vmem:[#allocation2] sm:$0xff] %v107
  // Predicated region
  $region18: #{energy_point_residual_forward.11} parent=0 // pred_check
    %p109 = pneg %p14
  $region19: #{energy_point_residual_forward.11} parent=0 // pred_check_branch
    %111 = sbr.rel (%p109) target = $region21
  $region20: #{energy_point_residual_forward.11} parent=0 // pred_region
    %v112 = vld [vmem:[#allocation2] sm:$0xff]
    %v113 = vld [vmem:[%s2] sm:$0x1]
    %v115 = vlaneseq
    %v116 = vshrl.u32 %v115, 7
    %v117 = vsub.s32 0, %v116
    %v118 = vrot.slane %v113, %v117
    %v120 = vadd.f32 %v112, %v118
    %121 = vst [vmem:[%s3] sm:$0xff] %v120
  $region21: #{energy_point_residual_forward.11} parent=0 // pred_fallthru
    _
  // Predicated region
  $region22: #{energy_point_residual_forward.11} parent=0 // pred_check
    _
  $region23: #{energy_point_residual_forward.11} parent=0 // pred_check_branch
    %123 = sbr.rel (0) target = $region25
  $region24: #{energy_point_residual_forward.11} parent=0 // pred_region
    _
  $region25: #{energy_point_residual_forward.11} parent=0 // pred_fallthru
    _
  // Predicated region
  $region26: #{energy_point_residual_forward.11} parent=0 // pred_check
    _
  $region27: #{energy_point_residual_forward.11} parent=0 // pred_check_branch
    %125 = sbr.rel (0) target = $region29
  $region28: #{energy_point_residual_forward.11} parent=0 // pred_region
    _
  $region29: #{energy_point_residual_forward.11} parent=0 // pred_fallthru
    _

</llo_original>
